<compile_context>
chip_gen: v6e
topology: v6e:2x2x1
jax: 0.10.0
libtpu: 0.0.40
codegen_flags: <defaults>
</compile_context>

<pallas_src>
import numpy as np
import jax
import jax.numpy as jnp
from jax.experimental import pallas as pl
from jax.experimental.pallas import tpu as pltpu

# Small, TPU-friendly sizes.
B = 2      # batch size (bags per key)
K = 2      # number of keys / features
E = 64     # rows per embedding table
D = 128    # embedding dim (lane-aligned)
P = 128    # max (padded) number of values per key (lane-aligned)


def _ebc_pooled_kernel(offs_ref, vals_ref, tables_ref, out_ref):
    """One fused step for all keys: batched segment-count + pooled matmul."""
    offs = offs_ref[...]          # [K, B+1] int32
    vals = vals_ref[...]          # [K, P]   int32 (pad = -1)
    tables = tables_ref[...]      # [K, E, D] float32

    n_keys, n_vals = vals.shape
    n_bags = offs.shape[1] - 1
    n_rows = tables.shape[1]

    # Segment membership S[k, b, p] = offsets[k, b] <= p < offsets[k, b+1]
    # (single vectorized compare; no per-bag Python loop).
    p_iota = jax.lax.broadcasted_iota(jnp.int32, (n_keys, n_bags, n_vals), 2)
    starts = offs[:, :n_bags][:, :, None]          # [K, B, 1]
    ends = offs[:, 1:][:, :, None]                 # [K, B, 1]
    seg = ((p_iota >= starts) & (p_iota < ends)).astype(jnp.float32)   # [K, B, P]

    # One-hot H[k, p, e] = (values[k, p] == e); padded positions (-1) give
    # all-zero rows and contribute nothing.
    e_iota = jax.lax.broadcasted_iota(jnp.int32, (n_keys, n_vals, n_rows), 2)
    onehot = (vals[:, :, None] == e_iota).astype(jnp.float32)          # [K, P, E]

    # Re-associated contraction: tiny [B,P]x[P,E] first, then [B,E]x[E,D].
    # Operands are exact 0/1 / small-count integers, so this is exact in f32.
    counts = jnp.einsum('kbp,kpe->kbe', seg, onehot,
                        preferred_element_type=jnp.float32)            # [K, B, E]
    out_ref[...] = jnp.einsum('kbe,ked->kbd', counts, tables,
                              preferred_element_type=jnp.float32)      # [K, B, D]


def ebc_pooled_pallas(offs_local, values_padded, tables):
    """offs_local: [K, B+1] i32, values_padded: [K, P] i32, tables: [K, E, D] f32."""
    pooled = pl.pallas_call(
        _ebc_pooled_kernel,
        out_shape=jax.ShapeDtypeStruct((K, B, D), jnp.float32),
        grid=(1,),
        in_specs=[
            pl.BlockSpec((K, B + 1), lambda i: (0, 0)),     # per-key bag offsets
            pl.BlockSpec((K, P), lambda i: (0, 0)),         # padded values (lane-major)
            # TODO(synk): for realistic E (and v7x's 64 MiB VMEM), tile tables per key /
            # per E-chunk (grid axis marked "arbitrary" + f32 accumulator) and replace
            # the one-hot gather with a scalar-prefetch-driven DMA row gather.
            pl.BlockSpec((K, E, D), lambda i: (0, 0, 0)),   # embedding tables (full)
        ],
        out_specs=pl.BlockSpec((K, B, D), lambda i: (0, 0, 0)),
        compiler_params=pltpu.CompilerParams(
            # Single fused step at toy sizes; at scale, shard batch/E tiles on a
            # "parallel" axis to use both TensorCores on v7x.
            dimension_semantics=("arbitrary",)),
    )(offs_local, values_padded, tables)
    # [K, B, D] -> [B, K*D]  (KeyedTensor.values() ordering); cheap host-side relayout.
    return jnp.transpose(pooled, (1, 0, 2)).reshape(B, K * D)


# ----------------------------------------------------------------------------
# KJT plumbing (host-side glue, mirrors KJTInputWrapper.forward semantics).
# ----------------------------------------------------------------------------
class KeyedJaggedTensor:
    """Minimal KJT: key-major flat values + lengths/offsets (one bag per key per batch)."""

    def __init__(self, keys, values, lengths=None, offsets=None):
        self.keys = keys
        self.values = np.asarray(values, dtype=np.int32)
        if offsets is None:
            assert lengths is not None
            lengths = np.asarray(lengths, dtype=np.int32)
            offsets = np.concatenate([np.zeros(1, np.int32), np.cumsum(lengths)]).astype(np.int32)
        self.offsets = np.asarray(offsets, dtype=np.int32)


class PallasEmbeddingBagCollection:
    """The wrapped `module_kjt_input`: sum-pooled EmbeddingBagCollection."""

    def __init__(self, tables):
        self.tables = tables  # jnp [K, E, D] f32

    def __call__(self, kjt: KeyedJaggedTensor):
        n_keys = len(kjt.keys)
        assert n_keys == K
        n_bags = (len(kjt.offsets) - 1) // n_keys
        assert n_bags == B

        values_padded = np.full((K, P), -1, dtype=np.int32)
        offs_local = np.zeros((K, B + 1), dtype=np.int32)
        for k in range(K):
            key_start = int(kjt.offsets[k * B])
            key_end = int(kjt.offsets[(k + 1) * B])
            n = key_end - key_start
            assert n <= P, "increase P"
            values_padded[k, :n] = kjt.values[key_start:key_end]
            for b in range(B + 1):
                offs_local[k, b] = int(kjt.offsets[k * B + b]) - key_start

        return ebc_pooled_pallas(
            jnp.asarray(offs_local),
            jnp.asarray(values_padded),
            self.tables,
        )


class KJTInputWrapper:
    """Mirrors torchrec's KJTInputWrapper.forward."""

    def __init__(self, module_kjt_input):
        self._module_kjt_input = module_kjt_input

    def forward(self, keys, values, lengths=None, offsets=None):
        kjt = KeyedJaggedTensor(keys=keys, values=values, lengths=lengths, offsets=offsets)
        return self._module_kjt_input(kjt)


if __name__ == "__main__":
    key = jax.random.PRNGKey(0)
    k_tab, k_val = jax.random.split(key)

    # Deterministic parameter init: stacked embedding tables [K, E, D].
    tables = (jax.random.normal(k_tab, (K, E, D), dtype=jnp.float32) * 0.05).astype(jnp.float32)

    # KJT inputs (key-major): lengths = bag sizes per (key, batch).
    keys = ["f1", "f2"]
    lengths = np.array([2, 3, 1, 4], dtype=np.int32)         # K * B entries
    total = int(lengths.sum())
    values = np.asarray(
        jax.random.randint(k_val, (total,), 0, E, dtype=jnp.int32))

    wrapper = KJTInputWrapper(PallasEmbeddingBagCollection(tables))
    out = wrapper.forward(keys, values, lengths=lengths)
    out = jax.block_until_ready(out)

    # Pure-numpy reference for correctness.
    tables_np = np.asarray(tables)
    offsets = np.concatenate([np.zeros(1, np.int32), np.cumsum(lengths)]).astype(np.int32)
    ref = np.zeros((B, K * D), dtype=np.float32)
    for k in range(K):
        for b in range(B):
            s, e = int(offsets[k * B + b]), int(offsets[k * B + b + 1])
            for i in range(s, e):
                ref[b, k * D:(k + 1) * D] += tables_np[k, int(values[i])]

    np.testing.assert_allclose(np.asarray(out), ref, rtol=1e-5, atol=1e-5)
    print("KERNEL_OK")
</pallas_src>

<mosaic_0001>
module attributes {stable_mosaic.version = 11 : i64} {
  func.func @_ebc_pooled_kernel(%arg0: i32, %arg1: memref<2x3xi32, #tpu.memory_space<vmem>>, %arg2: memref<2x128xi32, #tpu.memory_space<vmem>>, %arg3: memref<2x64x128xf32, #tpu.memory_space<vmem>>, %arg4: memref<2x2x128xf32, #tpu.memory_space<vmem>>) attributes {dimension_semantics = [#tpu.dimension_semantics<arbitrary>], iteration_bounds = array<i64: 1>, scalar_prefetch = 0 : i64, scratch_operands = 0 : i64, tpu.core_type = #tpu.core_type<tc>, window_params = [{pipeline_mode = #tpu.pipeline_mode<synchronous>, transform_indices = @transform_0, window_bounds = array<i64: 2, 3>}, {pipeline_mode = #tpu.pipeline_mode<synchronous>, transform_indices = @transform_1, window_bounds = array<i64: 2, 128>}, {pipeline_mode = #tpu.pipeline_mode<synchronous>, transform_indices = @transform_2, window_bounds = array<i64: 2, 64, 128>}, {pipeline_mode = #tpu.pipeline_mode<synchronous>, transform_indices = @transform_3, window_bounds = array<i64: 2, 2, 128>}]} {
    %c0 = arith.constant 0 : index
    %c0_0 = arith.constant 0 : index
    %0 = vector.load %arg1[%c0, %c0_0] : memref<2x3xi32, #tpu.memory_space<vmem>>, vector<2x3xi32>
    %c0_1 = arith.constant 0 : index
    %c0_2 = arith.constant 0 : index
    %1 = vector.load %arg2[%c0_1, %c0_2] : memref<2x128xi32, #tpu.memory_space<vmem>>, vector<2x128xi32>
    %c0_3 = arith.constant 0 : index
    %c0_4 = arith.constant 0 : index
    %c0_5 = arith.constant 0 : index
    %2 = vector.load %arg3[%c0_3, %c0_4, %c0_5] : memref<2x64x128xf32, #tpu.memory_space<vmem>>, vector<2x64x128xf32>
    %3 = tpu.iota {dimensions = array<i32: 2>} : vector<2x2x128xi32>
    %4 = vector.extract_strided_slice %0 {offsets = [0, 0], sizes = [2, 2], strides = [1, 1]} : vector<2x3xi32> to vector<2x2xi32>
    %5 = vector.shape_cast %4 : vector<2x2xi32> to vector<2x2x1xi32>
    %6 = vector.extract_strided_slice %0 {offsets = [0, 1], sizes = [2, 2], strides = [1, 1]} : vector<2x3xi32> to vector<2x2xi32>
    %7 = vector.shape_cast %6 : vector<2x2xi32> to vector<2x2x1xi32>
    %8 = vector.broadcast %5 : vector<2x2x1xi32> to vector<2x2x128xi32>
    %9 = arith.cmpi sge, %3, %8 : vector<2x2x128xi32>
    %10 = vector.broadcast %7 : vector<2x2x1xi32> to vector<2x2x128xi32>
    %11 = arith.cmpi slt, %3, %10 : vector<2x2x128xi32>
    %12 = arith.andi %9, %11 : vector<2x2x128xi1>
    %13 = arith.extui %12 : vector<2x2x128xi1> to vector<2x2x128xi32>
    %14 = arith.sitofp %13 : vector<2x2x128xi32> to vector<2x2x128xf32>
    %15 = tpu.iota {dimensions = array<i32: 2>} : vector<2x128x64xi32>
    %16 = vector.shape_cast %1 : vector<2x128xi32> to vector<2x128x1xi32>
    %17 = vector.broadcast %16 : vector<2x128x1xi32> to vector<2x128x64xi32>
    %18 = arith.cmpi eq, %17, %15 : vector<2x128x64xi32>
    %19 = arith.extui %18 : vector<2x128x64xi1> to vector<2x128x64xi32>
    %20 = arith.sitofp %19 : vector<2x128x64xi32> to vector<2x128x64xf32>
    "tpu.trace_start"() <{level = 10 : i32, message = "kbp,kpe->kbe"}> : () -> ()
    %cst = arith.constant dense<0.000000e+00> : vector<2x2x64xf32>
    %21 = tpu.matmul %14, %20, %cst {dimension_numbers = #tpu.dot_dimension_numbers<[2], [1], [1], [2], [0, 0, 0, 1, 1, 2], [0], [0]>} : vector<2x2x128xf32>, vector<2x128x64xf32>, vector<2x2x64xf32> -> vector<2x2x64xf32>
    "tpu.trace_stop"() : () -> ()
    "tpu.trace_start"() <{level = 10 : i32, message = "kbe,ked->kbd"}> : () -> ()
    %cst_6 = arith.constant dense<0.000000e+00> : vector<2x2x128xf32>
    %22 = tpu.matmul %21, %2, %cst_6 {dimension_numbers = #tpu.dot_dimension_numbers<[2], [1], [1], [2], [0, 0, 0, 1, 1, 2], [0], [0]>} : vector<2x2x64xf32>, vector<2x64x128xf32>, vector<2x2x128xf32> -> vector<2x2x128xf32>
    "tpu.trace_stop"() : () -> ()
    %c0_7 = arith.constant 0 : index
    %c0_8 = arith.constant 0 : index
    %c0_9 = arith.constant 0 : index
    %23 = vector.load %arg4[%c0_7, %c0_8, %c0_9] : memref<2x2x128xf32, #tpu.memory_space<vmem>>, vector<2x2x128xf32>
    tpu.vector_store %arg4[%c0_7, %c0_8, %c0_9], %22 {strides = array<i32>} : memref<2x2x128xf32, #tpu.memory_space<vmem>>, vector<2x2x128xf32>,
    return
  }
  func.func @transform_0(%arg0: i32) -> (i32, i32) {
    %c0_i32 = arith.constant 0 : i32
    %c0_i32_0 = arith.constant 0 : i32
    %c0_i32_1 = arith.constant 0 : i32
    return %c0_i32, %c0_i32_0 : i32, i32
  }
  func.func @transform_1(%arg0: i32) -> (i32, i32) {
    %c0_i32 = arith.constant 0 : i32
    %c0_i32_0 = arith.constant 0 : i32
    %c0_i32_1 = arith.constant 0 : i32
    return %c0_i32, %c0_i32_0 : i32, i32
  }
  func.func @transform_2(%arg0: i32) -> (i32, i32, i32) {
    %c0_i32 = arith.constant 0 : i32
    %c0_i32_0 = arith.constant 0 : i32
    %c0_i32_1 = arith.constant 0 : i32
    %c0_i32_2 = arith.constant 0 : i32
    return %c0_i32, %c0_i32_0, %c0_i32_1 : i32, i32, i32
  }
  func.func @transform_3(%arg0: i32) -> (i32, i32, i32) {
    %c0_i32 = arith.constant 0 : i32
    %c0_i32_0 = arith.constant 0 : i32
    %c0_i32_1 = arith.constant 0 : i32
    %c0_i32_2 = arith.constant 0 : i32
    return %c0_i32, %c0_i32_0, %c0_i32_1 : i32, i32, i32
  }
}

</mosaic_0001>

<llo_original>
// kernel: tpu_custom_call.1
$region0: #{tpu_custom_call.1}
  #allocation0 [shape = 'u32[]', space=smem, size = 0x4, offset = 0x4, fixed_abs, tag = 'smem constant byte address 0x4 - core index']
  #allocation1 [shape = 'u32[144,128]{1,0:T(1,128)}', space=vmem, size = 0x12000, scoped, tag = 'internal scratch']
  %s0 = inlined_call_operand.hbm [shape: s32[2,3], index: 0, kind: input, shape index: {}]
  %s1 = inlined_call_operand.hbm [shape: s32[2,128], index: 1, kind: input, shape index: {}]
  %s2 = inlined_call_operand.hbm [shape: f32[2,64,128], index: 2, kind: input, shape index: {}]
  %s3 = inlined_call_operand.hbm [shape: f32[2,2,128], index: 3, kind: output, shape index: {}]
  %s4 = sld [smem:[#allocation0]]
  $region34: #{tpu_custom_call.1} parent=0
    _
  %s6 = ssub.s32 1, %s4
  %s7 = scalar_select 0, %s6, %s4
  $region1: #{tpu_custom_call.1} parent=0
    #allocation2 [shape = 'u8[1024]{0}', space=vmem, size = 0x400, scoped, tag = 'input window, operand 0, single buffered']
    #allocation3 [shape = 's32[1]{0}', space=sflag, size = 0x4, scoped, tag = 'scoped memory for tpu_custom_call.1']
    #allocation4 [shape = 's32[1]{0}', space=sflag, size = 0x4, scoped, tag = 'scoped memory for tpu_custom_call.1']
    #allocation5 [shape = 'u8[1024]{0}', space=vmem, size = 0x400, scoped, tag = 'input window, operand 1, single buffered']
    #allocation6 [shape = 's32[1]{0}', space=sflag, size = 0x4, scoped, tag = 'scoped memory for tpu_custom_call.1']
    #allocation7 [shape = 'u8[65536]{0}', space=vmem, size = 0x10000, scoped, tag = 'input window, operand 2, single buffered']
    #allocation8 [shape = 'u8[2048]{0}', space=vmem, size = 0x800, scoped, tag = 'output window, operand 0, single buffered']
    %8 = vsyncpa [#allocation3], 0
    %9 = vsyncpa [#allocation6], 0
    %10 = vsyncpa [#allocation4], 0
    // Predicated region
    $region2: #{tpu_custom_call.1} parent=1 // pred_check
      _
    $region3: #{tpu_custom_call.1} parent=1 // pred_check_branch
      %12 = sbr.rel (0) target = $region5
    $region4: #{tpu_custom_call.1} parent=1 // pred_region
      %s14 = ssub.s32 32, 32
      %15 = vsyncadd [#allocation3], %s14
      %s17 = sshll.u32 [#allocation2], 4
      %s18 = int_to_ptr.vmem [resolvable:$true] %s17
      %20 = dma.hbm_to_vmem [thread:$0]  %s0, 32, %s18, [#allocation3]
    $region5: #{tpu_custom_call.1} parent=1 // pred_fallthru
      _
    // Predicated region
    $region6: #{tpu_custom_call.1} parent=1 // pred_check
      _
    $region7: #{tpu_custom_call.1} parent=1 // pred_check_branch
      %22 = sbr.rel (0) target = $region9
    $region8: #{tpu_custom_call.1} parent=1 // pred_region
      %s24 = ssub.s32 32, 32
      %25 = vsyncadd [#allocation6], %s24
      %s27 = sshll.u32 [#allocation5], 4
      %s28 = int_to_ptr.vmem [resolvable:$true] %s27
      %30 = dma.hbm_to_vmem [thread:$0]  %s1, 32, %s28, [#allocation6]
    $region9: #{tpu_custom_call.1} parent=1 // pred_fallthru
      _
    // Predicated region
    $region10: #{tpu_custom_call.1} parent=1 // pred_check
      _
    $region11: #{tpu_custom_call.1} parent=1 // pred_check_branch
      %32 = sbr.rel (0) target = $region13
    $region12: #{tpu_custom_call.1} parent=1 // pred_region
      %s34 = ssub.s32 2048, 2048
      %35 = vsyncadd [#allocation6], %s34
      %s36 = sshll.u32 [#allocation7], 4
      %s37 = int_to_ptr.vmem [resolvable:$true] %s36
      %42 = dma.hbm_to_vmem [thread:$0]  %s2, 2048, %s37, [#allocation6], 128, 128, 8
    $region13: #{tpu_custom_call.1} parent=1 // pred_fallthru
      _
    // Predicated region
    $region14: #{tpu_custom_call.1} parent=1 // pred_check
      _
    $region15: #{tpu_custom_call.1} parent=1 // pred_check_branch
      %44 = sbr.rel (0) target = $region17
    $region16: #{tpu_custom_call.1} parent=1 // pred_region
      %45 = dma.done [#allocation3], 32
    $region17: #{tpu_custom_call.1} parent=1 // pred_fallthru
      _
    // Predicated region
    $region18: #{tpu_custom_call.1} parent=1 // pred_check
      _
    $region19: #{tpu_custom_call.1} parent=1 // pred_check_branch
      %47 = sbr.rel (0) target = $region21
    $region20: #{tpu_custom_call.1} parent=1 // pred_region
      %48 = dma.done [#allocation6], 32
    $region21: #{tpu_custom_call.1} parent=1 // pred_fallthru
      _
    // Predicated region
    $region22: #{tpu_custom_call.1} parent=1 // pred_check
      _
    $region23: #{tpu_custom_call.1} parent=1 // pred_check_branch
      %50 = sbr.rel (0) target = $region25
    $region24: #{tpu_custom_call.1} parent=1 // pred_region
      %51 = dma.done [#allocation6], 2048
    $region25: #{tpu_custom_call.1} parent=1 // pred_fallthru
      _
    %v52 = vld [vmem:[#allocation2] sm:$0x3]
    %v53 = vld [vmem:[#allocation5] sm:$0x3]
    %v54 = vld [vmem:[#allocation7] sm:$0xff]
    %v55 = vld [vmem:[#allocation7 + $0x8] sm:$0xff]
    %v56 = vld [vmem:[#allocation7 + $0x10] sm:$0xff]
    %v57 = vld [vmem:[#allocation7 + $0x18] sm:$0xff]
    %v58 = vld [vmem:[#allocation7 + $0x20] sm:$0xff]
    %v59 = vld [vmem:[#allocation7 + $0x28] sm:$0xff]
    %v60 = vld [vmem:[#allocation7 + $0x30] sm:$0xff]
    %v61 = vld [vmem:[#allocation7 + $0x38] sm:$0xff]
    %v62 = vld [vmem:[#allocation7 + $0x40] sm:$0xff]
    %v63 = vld [vmem:[#allocation7 + $0x48] sm:$0xff]
    %v64 = vld [vmem:[#allocation7 + $0x50] sm:$0xff]
    %v65 = vld [vmem:[#allocation7 + $0x58] sm:$0xff]
    %v66 = vld [vmem:[#allocation7 + $0x60] sm:$0xff]
    %v67 = vld [vmem:[#allocation7 + $0x68] sm:$0xff]
    %v68 = vld [vmem:[#allocation7 + $0x70] sm:$0xff]
    %v69 = vld [vmem:[#allocation7 + $0x78] sm:$0xff]
    %v70 = vlaneseq
    %v71 = vand.u32 %v70, 127
    %v72 = vlaneseq
    %v73 = vshrl.u32 %v72, 7
    %v74 = vsub.s32 0, %v73
    %v75 = vrot.slane %v52, %v74
    %77 = vbcast.lane.b32.xlu0 %v75, 256
    %v78 = vpop.permute.xlu0 %77
    %v79 = vlaneseq
    %v80 = vshrl.u32 %v79, 7
    %v81 = vsub.s32 1, %v80
    %v82 = vrot.slane %v52, %v81
    %84 = vbcast.lane.b32.xlu0 %v82, 256
    %v85 = vpop.permute.xlu0 %84
    %s87 = sor.u32 256, 1
    %88 = vbcast.lane.b32.xlu0 %v75, %s87
    %v89 = vpop.permute.xlu0 %88
    %s91 = sor.u32 256, 1
    %92 = vbcast.lane.b32.xlu0 %v82, %s91
    %v93 = vpop.permute.xlu0 %92
    %vm94 = vcmp.ge.s32.totalorder %v71, %v78
    %vm95 = vcmp.ge.s32.totalorder %v71, %v85
    %vm96 = vcmp.lt.s32.totalorder %v71, %v89
    %vm97 = vcmp.lt.s32.totalorder %v71, %v93
    %vm98 = vmand %vm94, %vm96
    %vm99 = vmand %vm95, %vm97
    %v100 = vsel %vm98, 1, 0
    %v101 = vsel %vm99, 1, 0
    %v102 = vcvt.s32.f32 %v100
    %v103 = vcvt.s32.f32 %v101
    %v104 = vlaneseq
    %v105 = vshrl.u32 %v104, 7
    %v106 = vsub.s32 0, %v105
    %v107 = vrot.slane %v53, %v106
    %109 = vbcast.lane.b32.xlu0 %v107, 256
    %v110 = vpop.permute.xlu0 %109
    %s112 = sor.u32 256, 8
    %113 = vbcast.lane.b32.xlu0 %v107, %s112
    %v114 = vpop.permute.xlu0 %113
    %s116 = sor.u32 256, 16
    %117 = vbcast.lane.b32.xlu0 %v107, %s116
    %v118 = vpop.permute.xlu0 %117
    %s120 = sor.u32 256, 24
    %121 = vbcast.lane.b32.xlu0 %v107, %s120
    %v122 = vpop.permute.xlu0 %121
    %s124 = sor.u32 256, 32
    %125 = vbcast.lane.b32.xlu0 %v107, %s124
    %v126 = vpop.permute.xlu0 %125
    %s128 = sor.u32 256, 40
    %129 = vbcast.lane.b32.xlu0 %v107, %s128
    %v130 = vpop.permute.xlu0 %129
    %s132 = sor.u32 256, 48
    %133 = vbcast.lane.b32.xlu0 %v107, %s132
    %v134 = vpop.permute.xlu0 %133
    %s136 = sor.u32 256, 56
    %137 = vbcast.lane.b32.xlu0 %v107, %s136
    %v138 = vpop.permute.xlu0 %137
    %s140 = sor.u32 256, 64
    %141 = vbcast.lane.b32.xlu0 %v107, %s140
    %v142 = vpop.permute.xlu0 %141
    %s144 = sor.u32 256, 72
    %145 = vbcast.lane.b32.xlu0 %v107, %s144
    %v146 = vpop.permute.xlu0 %145
    %s148 = sor.u32 256, 80
    %149 = vbcast.lane.b32.xlu0 %v107, %s148
    %v150 = vpop.permute.xlu0 %149
    %s152 = sor.u32 256, 88
    %153 = vbcast.lane.b32.xlu0 %v107, %s152
    %v154 = vpop.permute.xlu0 %153
    %s156 = sor.u32 256, 96
    %157 = vbcast.lane.b32.xlu0 %v107, %s156
    %v158 = vpop.permute.xlu0 %157
    %s160 = sor.u32 256, 104
    %161 = vbcast.lane.b32.xlu0 %v107, %s160
    %v162 = vpop.permute.xlu0 %161
    %s164 = sor.u32 256, 112
    %165 = vbcast.lane.b32.xlu0 %v107, %s164
    %v166 = vpop.permute.xlu0 %165
    %s168 = sor.u32 256, 120
    %169 = vbcast.lane.b32.xlu0 %v107, %s168
    %v170 = vpop.permute.xlu0 %169
    %v171 = vlaneseq
    %v172 = vshrl.u32 %v171, 7
    %v173 = vsub.s32 1, %v172
    %v174 = vrot.slane %v53, %v173
    %176 = vbcast.lane.b32.xlu0 %v174, 256
    %v177 = vpop.permute.xlu0 %176
    %s179 = sor.u32 256, 8
    %180 = vbcast.lane.b32.xlu0 %v174, %s179
    %v181 = vpop.permute.xlu0 %180
    %s183 = sor.u32 256, 16
    %184 = vbcast.lane.b32.xlu0 %v174, %s183
    %v185 = vpop.permute.xlu0 %184
    %s187 = sor.u32 256, 24
    %188 = vbcast.lane.b32.xlu0 %v174, %s187
    %v189 = vpop.permute.xlu0 %188
    %s191 = sor.u32 256, 32
    %192 = vbcast.lane.b32.xlu0 %v174, %s191
    %v193 = vpop.permute.xlu0 %192
    %s195 = sor.u32 256, 40
    %196 = vbcast.lane.b32.xlu0 %v174, %s195
    %v197 = vpop.permute.xlu0 %196
    %s199 = sor.u32 256, 48
    %200 = vbcast.lane.b32.xlu0 %v174, %s199
    %v201 = vpop.permute.xlu0 %200
    %s203 = sor.u32 256, 56
    %204 = vbcast.lane.b32.xlu0 %v174, %s203
    %v205 = vpop.permute.xlu0 %204
    %s207 = sor.u32 256, 64
    %208 = vbcast.lane.b32.xlu0 %v174, %s207
    %v209 = vpop.permute.xlu0 %208
    %s211 = sor.u32 256, 72
    %212 = vbcast.lane.b32.xlu0 %v174, %s211
    %v213 = vpop.permute.xlu0 %212
    %s215 = sor.u32 256, 80
    %216 = vbcast.lane.b32.xlu0 %v174, %s215
    %v217 = vpop.permute.xlu0 %216
    %s219 = sor.u32 256, 88
    %220 = vbcast.lane.b32.xlu0 %v174, %s219
    %v221 = vpop.permute.xlu0 %220
    %s223 = sor.u32 256, 96
    %224 = vbcast.lane.b32.xlu0 %v174, %s223
    %v225 = vpop.permute.xlu0 %224
    %s227 = sor.u32 256, 104
    %228 = vbcast.lane.b32.xlu0 %v174, %s227
    %v229 = vpop.permute.xlu0 %228
    %s231 = sor.u32 256, 112
    %232 = vbcast.lane.b32.xlu0 %v174, %s231
    %v233 = vpop.permute.xlu0 %232
    %s235 = sor.u32 256, 120
    %236 = vbcast.lane.b32.xlu0 %v174, %s235
    %v237 = vpop.permute.xlu0 %236
    %vm238 = vcmp.eq.s32.totalorder %v110, %v71
    %vm239 = vcmp.eq.s32.totalorder %v114, %v71
    %vm240 = vcmp.eq.s32.totalorder %v118, %v71
    %vm241 = vcmp.eq.s32.totalorder %v122, %v71
    %vm242 = vcmp.eq.s32.totalorder %v126, %v71
    %vm243 = vcmp.eq.s32.totalorder %v130, %v71
    %vm244 = vcmp.eq.s32.totalorder %v134, %v71
    %vm245 = vcmp.eq.s32.totalorder %v138, %v71
    %vm246 = vcmp.eq.s32.totalorder %v142, %v71
    %vm247 = vcmp.eq.s32.totalorder %v146, %v71
    %vm248 = vcmp.eq.s32.totalorder %v150, %v71
    %vm249 = vcmp.eq.s32.totalorder %v154, %v71
    %vm250 = vcmp.eq.s32.totalorder %v158, %v71
    %vm251 = vcmp.eq.s32.totalorder %v162, %v71
    %vm252 = vcmp.eq.s32.totalorder %v166, %v71
    %vm253 = vcmp.eq.s32.totalorder %v170, %v71
    %vm254 = vcmp.eq.s32.totalorder %v177, %v71
    %vm255 = vcmp.eq.s32.totalorder %v181, %v71
    %vm256 = vcmp.eq.s32.totalorder %v185, %v71
    %vm257 = vcmp.eq.s32.totalorder %v189, %v71
    %vm258 = vcmp.eq.s32.totalorder %v193, %v71
    %vm259 = vcmp.eq.s32.totalorder %v197, %v71
    %vm260 = vcmp.eq.s32.totalorder %v201, %v71
    %vm261 = vcmp.eq.s32.totalorder %v205, %v71
    %vm262 = vcmp.eq.s32.totalorder %v209, %v71
    %vm263 = vcmp.eq.s32.totalorder %v213, %v71
    %vm264 = vcmp.eq.s32.totalorder %v217, %v71
    %vm265 = vcmp.eq.s32.totalorder %v221, %v71
    %vm266 = vcmp.eq.s32.totalorder %v225, %v71
    %vm267 = vcmp.eq.s32.totalorder %v229, %v71
    %vm268 = vcmp.eq.s32.totalorder %v233, %v71
    %vm269 = vcmp.eq.s32.totalorder %v237, %v71
    %v270 = vsel %vm238, 1, 0
    %v271 = vsel %vm239, 1, 0
    %v272 = vsel %vm240, 1, 0
    %v273 = vsel %vm241, 1, 0
    %v274 = vsel %vm242, 1, 0
    %v275 = vsel %vm243, 1, 0
    %v276 = vsel %vm244, 1, 0
    %v277 = vsel %vm245, 1, 0
    %v278 = vsel %vm246, 1, 0
    %v279 = vsel %vm247, 1, 0
    %v280 = vsel %vm248, 1, 0
    %v281 = vsel %vm249, 1, 0
    %v282 = vsel %vm250, 1, 0
    %v283 = vsel %vm251, 1, 0
    %v284 = vsel %vm252, 1, 0
    %v285 = vsel %vm253, 1, 0
    %v286 = vsel %vm254, 1, 0
    %v287 = vsel %vm255, 1, 0
    %v288 = vsel %vm256, 1, 0
    %v289 = vsel %vm257, 1, 0
    %v290 = vsel %vm258, 1, 0
    %v291 = vsel %vm259, 1, 0
    %v292 = vsel %vm260, 1, 0
    %v293 = vsel %vm261, 1, 0
    %v294 = vsel %vm262, 1, 0
    %v295 = vsel %vm263, 1, 0
    %v296 = vsel %vm264, 1, 0
    %v297 = vsel %vm265, 1, 0
    %v298 = vsel %vm266, 1, 0
    %v299 = vsel %vm267, 1, 0
    %v300 = vsel %vm268, 1, 0
    %v301 = vsel %vm269, 1, 0
    %v302 = vcvt.s32.f32 %v270
    %v303 = vcvt.s32.f32 %v271
    %v304 = vcvt.s32.f32 %v272
    %v305 = vcvt.s32.f32 %v273
    %v306 = vcvt.s32.f32 %v274
    %v307 = vcvt.s32.f32 %v275
    %v308 = vcvt.s32.f32 %v276
    %v309 = vcvt.s32.f32 %v277
    %v310 = vcvt.s32.f32 %v278
    %v311 = vcvt.s32.f32 %v279
    %v312 = vcvt.s32.f32 %v280
    %v313 = vcvt.s32.f32 %v281
    %v314 = vcvt.s32.f32 %v282
    %v315 = vcvt.s32.f32 %v283
    %v316 = vcvt.s32.f32 %v284
    %v317 = vcvt.s32.f32 %v285
    %v318 = vcvt.s32.f32 %v286
    %v319 = vcvt.s32.f32 %v287
    %v320 = vcvt.s32.f32 %v288
    %v321 = vcvt.s32.f32 %v289
    %v322 = vcvt.s32.f32 %v290
    %v323 = vcvt.s32.f32 %v291
    %v324 = vcvt.s32.f32 %v292
    %v325 = vcvt.s32.f32 %v293
    %v326 = vcvt.s32.f32 %v294
    %v327 = vcvt.s32.f32 %v295
    %v328 = vcvt.s32.f32 %v296
    %v329 = vcvt.s32.f32 %v297
    %v330 = vcvt.s32.f32 %v298
    %v331 = vcvt.s32.f32 %v299
    %v332 = vcvt.s32.f32 %v300
    %v333 = vcvt.s32.f32 %v301
    %334 = vmatprep.subr.mxu0 0.0
    %335 = vmatpush1.msra.mxu0 %v317
    %336 = vmatprep.subr.mxu0 0.0
    %337 = vmatpush1.msra.mxu0 %v316
    %338 = vmatprep.subr.mxu0 0.0
    %339 = vmatpush1.msra.mxu0 %v315
    %340 = vmatprep.subr.mxu0 0.0
    %341 = vmatpush1.msra.mxu0 %v314
    %342 = vmatprep.subr.mxu0 0.0
    %343 = vmatpush1.msra.mxu0 %v313
    %344 = vmatprep.subr.mxu0 0.0
    %345 = vmatpush1.msra.mxu0 %v312
    %346 = vmatprep.subr.mxu0 0.0
    %347 = vmatpush1.msra.mxu0 %v311
    %348 = vmatprep.subr.mxu0 0.0
    %349 = vmatpush1.msra.mxu0 %v310
    %350 = vmatprep.subr.mxu0 0.0
    %351 = vmatpush1.msra.mxu0 %v309
    %352 = vmatprep.subr.mxu0 0.0
    %353 = vmatpush1.msra.mxu0 %v308
    %354 = vmatprep.subr.mxu0 0.0
    %355 = vmatpush1.msra.mxu0 %v307
    %356 = vmatprep.subr.mxu0 0.0
    %357 = vmatpush1.msra.mxu0 %v306
    %358 = vmatprep.subr.mxu0 0.0
    %359 = vmatpush1.msra.mxu0 %v305
    %360 = vmatprep.subr.mxu0 0.0
    %361 = vmatpush1.msra.mxu0 %v304
    %362 = vmatprep.subr.mxu0 0.0
    %363 = vmatpush1.msra.mxu0 %v303
    %364 = vmatprep.subr.mxu0 0.0
    %365 = vmatpush1.msra.mxu0 %v302
    %366 = vmatprep.subr.mxu0 0.0
    %367 = vmatpush2.msra.mxu0 0.0
    %368 = vmatprep.subr.mxu0 0.0
    %369 = vmatpush2.msra.mxu0 0.0
    %370 = vmatprep.subr.mxu0 0.0
    %371 = vmatpush2.msra.mxu0 0.0
    %372 = vmatprep.subr.mxu0 0.0
    %373 = vmatpush2.msra.mxu0 0.0
    %374 = vmatprep.subr.mxu0 0.0
    %375 = vmatpush2.msra.mxu0 0.0
    %376 = vmatprep.subr.mxu0 0.0
    %377 = vmatpush2.msra.mxu0 0.0
    %378 = vmatprep.subr.mxu0 0.0
    %379 = vmatpush2.msra.mxu0 0.0
    %380 = vmatprep.subr.mxu0 0.0
    %381 = vmatpush2.msra.mxu0 0.0
    %382 = vmatprep.subr.mxu0 0.0
    %383 = vmatpush2.msra.mxu0 0.0
    %384 = vmatprep.subr.mxu0 0.0
    %385 = vmatpush2.msra.mxu0 0.0
    %386 = vmatprep.subr.mxu0 0.0
    %387 = vmatpush2.msra.mxu0 0.0
    %388 = vmatprep.subr.mxu0 0.0
    %389 = vmatpush2.msra.mxu0 0.0
    %390 = vmatprep.subr.mxu0 0.0
    %391 = vmatpush2.msra.mxu0 0.0
    %392 = vmatprep.subr.mxu0 0.0
    %393 = vmatpush2.msra.mxu0 0.0
    %394 = vmatprep.subr.mxu0 0.0
    %395 = vmatpush2.msra.mxu0 0.0
    %396 = vmatprep.subr.mxu0 0.0
    %397 = vmatpush2.msra.mxu0 0.0
    %398 = vmatprep.mubr.f32.mxu0 0.0
    %399 = vmatmul.mubr.f32.gmra.mxu0 %v102
    %v400 = vpop.f32.mrf.mxu0
    %v401 = vadd.f32 0.0, %v400
    %v402 = vpop.f32.mrf.mxu0
    %403 = vdwg.mxu0
    %404 = vmatprep.subr.mxu0 0.0
    %405 = vmatpush1.msra.mxu0 %v333
    %406 = vmatprep.subr.mxu0 0.0
    %407 = vmatpush1.msra.mxu0 %v332
    %408 = vmatprep.subr.mxu0 0.0
    %409 = vmatpush1.msra.mxu0 %v331
    %410 = vmatprep.subr.mxu0 0.0
    %411 = vmatpush1.msra.mxu0 %v330
    %412 = vmatprep.subr.mxu0 0.0
    %413 = vmatpush1.msra.mxu0 %v329
    %414 = vmatprep.subr.mxu0 0.0
    %415 = vmatpush1.msra.mxu0 %v328
    %416 = vmatprep.subr.mxu0 0.0
    %417 = vmatpush1.msra.mxu0 %v327
    %418 = vmatprep.subr.mxu0 0.0
    %419 = vmatpush1.msra.mxu0 %v326
    %420 = vmatprep.subr.mxu0 0.0
    %421 = vmatpush1.msra.mxu0 %v325
    %422 = vmatprep.subr.mxu0 0.0
    %423 = vmatpush1.msra.mxu0 %v324
    %424 = vmatprep.subr.mxu0 0.0
    %425 = vmatpush1.msra.mxu0 %v323
    %426 = vmatprep.subr.mxu0 0.0
    %427 = vmatpush1.msra.mxu0 %v322
    %428 = vmatprep.subr.mxu0 0.0
    %429 = vmatpush1.msra.mxu0 %v321
    %430 = vmatprep.subr.mxu0 0.0
    %431 = vmatpush1.msra.mxu0 %v320
    %432 = vmatprep.subr.mxu0 0.0
    %433 = vmatpush1.msra.mxu0 %v319
    %434 = vmatprep.subr.mxu0 0.0
    %435 = vmatpush1.msra.mxu0 %v318
    %436 = vmatprep.subr.mxu0 0.0
    %437 = vmatpush2.msra.mxu0 0.0
    %438 = vmatprep.subr.mxu0 0.0
    %439 = vmatpush2.msra.mxu0 0.0
    %440 = vmatprep.subr.mxu0 0.0
    %441 = vmatpush2.msra.mxu0 0.0
    %442 = vmatprep.subr.mxu0 0.0
    %443 = vmatpush2.msra.mxu0 0.0
    %444 = vmatprep.subr.mxu0 0.0
    %445 = vmatpush2.msra.mxu0 0.0
    %446 = vmatprep.subr.mxu0 0.0
    %447 = vmatpush2.msra.mxu0 0.0
    %448 = vmatprep.subr.mxu0 0.0
    %449 = vmatpush2.msra.mxu0 0.0
    %450 = vmatprep.subr.mxu0 0.0
    %451 = vmatpush2.msra.mxu0 0.0
    %452 = vmatprep.subr.mxu0 0.0
    %453 = vmatpush2.msra.mxu0 0.0
    %454 = vmatprep.subr.mxu0 0.0
    %455 = vmatpush2.msra.mxu0 0.0
    %456 = vmatprep.subr.mxu0 0.0
    %457 = vmatpush2.msra.mxu0 0.0
    %458 = vmatprep.subr.mxu0 0.0
    %459 = vmatpush2.msra.mxu0 0.0
    %460 = vmatprep.subr.mxu0 0.0
    %461 = vmatpush2.msra.mxu0 0.0
    %462 = vmatprep.subr.mxu0 0.0
    %463 = vmatpush2.msra.mxu0 0.0
    %464 = vmatprep.subr.mxu0 0.0
    %465 = vmatpush2.msra.mxu0 0.0
    %466 = vmatprep.subr.mxu0 0.0
    %467 = vmatpush2.msra.mxu0 0.0
    %468 = vmatprep.mubr.f32.mxu0 0.0
    %469 = vmatmul.mubr.f32.gmra.mxu0 %v103
    %v470 = vpop.f32.mrf.mxu0
    %v471 = vadd.f32 0.0, %v470
    %v472 = vpop.f32.mrf.mxu0
    %473 = vdwg.mxu0
    %vm474 = vcmask 523264
    %v476 = vsel %vm474, %v401, 0
    %478 = vmatprep.subr.mxu0 0.0
    %479 = vmatpush1.msra.mxu0 0.0
    %480 = vmatprep.subr.mxu0 0.0
    %481 = vmatpush1.msra.mxu0 0.0
    %482 = vmatprep.subr.mxu0 0.0
    %483 = vmatpush1.msra.mxu0 0.0
    %484 = vmatprep.subr.mxu0 0.0
    %485 = vmatpush1.msra.mxu0 0.0
    %486 = vmatprep.subr.mxu0 0.0
    %487 = vmatpush1.msra.mxu0 0.0
    %488 = vmatprep.subr.mxu0 0.0
    %489 = vmatpush1.msra.mxu0 0.0
    %490 = vmatprep.subr.mxu0 0.0
    %491 = vmatpush1.msra.mxu0 0.0
    %492 = vmatprep.subr.mxu0 0.0
    %493 = vmatpush1.msra.mxu0 0.0
    %494 = vmatprep.subr.mxu0 0.0
    %495 = vmatpush1.msra.mxu0 %v61
    %496 = vmatprep.subr.mxu0 0.0
    %497 = vmatpush1.msra.mxu0 %v60
    %498 = vmatprep.subr.mxu0 0.0
    %499 = vmatpush1.msra.mxu0 %v59
    %500 = vmatprep.subr.mxu0 0.0
    %501 = vmatpush1.msra.mxu0 %v58
    %502 = vmatprep.subr.mxu0 0.0
    %503 = vmatpush1.msra.mxu0 %v57
    %504 = vmatprep.subr.mxu0 0.0
    %505 = vmatpush1.msra.mxu0 %v56
    %506 = vmatprep.subr.mxu0 0.0
    %507 = vmatpush1.msra.mxu0 %v55
    %508 = vmatprep.subr.mxu0 0.0
    %509 = vmatpush1.msra.mxu0 %v54
    %510 = vmatprep.subr.mxu0 0.0
    %511 = vmatpush2.msra.mxu0 0.0
    %512 = vmatprep.subr.mxu0 0.0
    %513 = vmatpush2.msra.mxu0 0.0
    %514 = vmatprep.subr.mxu0 0.0
    %515 = vmatpush2.msra.mxu0 0.0
    %516 = vmatprep.subr.mxu0 0.0
    %517 = vmatpush2.msra.mxu0 0.0
    %518 = vmatprep.subr.mxu0 0.0
    %519 = vmatpush2.msra.mxu0 0.0
    %520 = vmatprep.subr.mxu0 0.0
    %521 = vmatpush2.msra.mxu0 0.0
    %522 = vmatprep.subr.mxu0 0.0
    %523 = vmatpush2.msra.mxu0 0.0
    %524 = vmatprep.subr.mxu0 0.0
    %525 = vmatpush2.msra.mxu0 0.0
    %526 = vmatprep.subr.mxu0 0.0
    %527 = vmatpush2.msra.mxu0 0.0
    %528 = vmatprep.subr.mxu0 0.0
    %529 = vmatpush2.msra.mxu0 0.0
    %530 = vmatprep.subr.mxu0 0.0
    %531 = vmatpush2.msra.mxu0 0.0
    %532 = vmatprep.subr.mxu0 0.0
    %533 = vmatpush2.msra.mxu0 0.0
    %534 = vmatprep.subr.mxu0 0.0
    %535 = vmatpush2.msra.mxu0 0.0
    %536 = vmatprep.subr.mxu0 0.0
    %537 = vmatpush2.msra.mxu0 0.0
    %538 = vmatprep.subr.mxu0 0.0
    %539 = vmatpush2.msra.mxu0 0.0
    %540 = vmatprep.subr.mxu0 0.0
    %541 = vmatpush2.msra.mxu0 0.0
    %542 = vmatprep.mubr.f32.mxu0 0.0
    %543 = vmatmul.mubr.f32.gmra.mxu0 %v476
    %v544 = vpop.f32.mrf.mxu0
    %v545 = vadd.f32 0.0, %v544
    %v546 = vpop.f32.mrf.mxu0
    %547 = vdwg.mxu0
    %v549 = vsel %vm474, %v471, 0
    %551 = vmatprep.subr.mxu0 0.0
    %552 = vmatpush1.msra.mxu0 0.0
    %553 = vmatprep.subr.mxu0 0.0
    %554 = vmatpush1.msra.mxu0 0.0
    %555 = vmatprep.subr.mxu0 0.0
    %556 = vmatpush1.msra.mxu0 0.0
    %557 = vmatprep.subr.mxu0 0.0
    %558 = vmatpush1.msra.mxu0 0.0
    %559 = vmatprep.subr.mxu0 0.0
    %560 = vmatpush1.msra.mxu0 0.0
    %561 = vmatprep.subr.mxu0 0.0
    %562 = vmatpush1.msra.mxu0 0.0
    %563 = vmatprep.subr.mxu0 0.0
    %564 = vmatpush1.msra.mxu0 0.0
    %565 = vmatprep.subr.mxu0 0.0
    %566 = vmatpush1.msra.mxu0 0.0
    %567 = vmatprep.subr.mxu0 0.0
    %568 = vmatpush1.msra.mxu0 %v69
    %569 = vmatprep.subr.mxu0 0.0
    %570 = vmatpush1.msra.mxu0 %v68
    %571 = vmatprep.subr.mxu0 0.0
    %572 = vmatpush1.msra.mxu0 %v67
    %573 = vmatprep.subr.mxu0 0.0
    %574 = vmatpush1.msra.mxu0 %v66
    %575 = vmatprep.subr.mxu0 0.0
    %576 = vmatpush1.msra.mxu0 %v65
    %577 = vmatprep.subr.mxu0 0.0
    %578 = vmatpush1.msra.mxu0 %v64
    %579 = vmatprep.subr.mxu0 0.0
    %580 = vmatpush1.msra.mxu0 %v63
    %581 = vmatprep.subr.mxu0 0.0
    %582 = vmatpush1.msra.mxu0 %v62
    %583 = vmatprep.subr.mxu0 0.0
    %584 = vmatpush2.msra.mxu0 0.0
    %585 = vmatprep.subr.mxu0 0.0
    %586 = vmatpush2.msra.mxu0 0.0
    %587 = vmatprep.subr.mxu0 0.0
    %588 = vmatpush2.msra.mxu0 0.0
    %589 = vmatprep.subr.mxu0 0.0
    %590 = vmatpush2.msra.mxu0 0.0
    %591 = vmatprep.subr.mxu0 0.0
    %592 = vmatpush2.msra.mxu0 0.0
    %593 = vmatprep.subr.mxu0 0.0
    %594 = vmatpush2.msra.mxu0 0.0
    %595 = vmatprep.subr.mxu0 0.0
    %596 = vmatpush2.msra.mxu0 0.0
    %597 = vmatprep.subr.mxu0 0.0
    %598 = vmatpush2.msra.mxu0 0.0
    %599 = vmatprep.subr.mxu0 0.0
    %600 = vmatpush2.msra.mxu0 0.0
    %601 = vmatprep.subr.mxu0 0.0
    %602 = vmatpush2.msra.mxu0 0.0
    %603 = vmatprep.subr.mxu0 0.0
    %604 = vmatpush2.msra.mxu0 0.0
    %605 = vmatprep.subr.mxu0 0.0
    %606 = vmatpush2.msra.mxu0 0.0
    %607 = vmatprep.subr.mxu0 0.0
    %608 = vmatpush2.msra.mxu0 0.0
    %609 = vmatprep.subr.mxu0 0.0
    %610 = vmatpush2.msra.mxu0 0.0
    %611 = vmatprep.subr.mxu0 0.0
    %612 = vmatpush2.msra.mxu0 0.0
    %613 = vmatprep.subr.mxu0 0.0
    %614 = vmatpush2.msra.mxu0 0.0
    %615 = vmatprep.mubr.f32.mxu0 0.0
    %616 = vmatmul.mubr.f32.gmra.mxu0 %v549
    %v617 = vpop.f32.mrf.mxu0
    %v618 = vadd.f32 0.0, %v617
    %v619 = vpop.f32.mrf.mxu0
    %620 = vdwg.mxu0
    %621 = vst [vmem:[#allocation8] sm:$0x3] %v545
    %622 = vst [vmem:[#allocation8 + $0x2] sm:$0x3] %v618
    // Predicated region
    $region26: #{tpu_custom_call.1} parent=1 // pred_check
      _
    $region27: #{tpu_custom_call.1} parent=1 // pred_check_branch
      %624 = sbr.rel (0) target = $region29
    $region28: #{tpu_custom_call.1} parent=1 // pred_region
      %s626 = ssub.s32 64, 64
      %627 = vsyncadd [#allocation4], %s626
      %s628 = sshll.u32 [#allocation8], 4
      %s629 = int_to_ptr.vmem [resolvable:$true] %s628
      %634 = dma.vmem_to_hbm [thread:$0]  %s629, 64, %s3, [#allocation4], 32, 32, 2
    $region29: #{tpu_custom_call.1} parent=1 // pred_fallthru
      _
    // Predicated region
    $region30: #{tpu_custom_call.1} parent=1 // pred_check
      _
    $region31: #{tpu_custom_call.1} parent=1 // pred_check_branch
      %636 = sbr.rel (0) target = $region33
    $region32: #{tpu_custom_call.1} parent=1 // pred_region
      %637 = dma.done [#allocation4], 64
    $region33: #{tpu_custom_call.1} parent=1 // pred_fallthru
      _
    %638 = vsyncpa [#allocation3], 1
    %639 = vsyncpa [#allocation6], 1
    %640 = vsyncpa [#allocation4], 1

</llo_original>
